<compile_context>
chip_gen: v5e
topology: v5e:2x2
jax: 0.10.0
libtpu: 0.0.40
codegen_flags: <defaults>
</compile_context>

<pallas_src>
import math

import numpy as np
import jax
import jax.numpy as jnp
from jax import lax
from jax.experimental import pallas as pl
from jax.experimental.pallas import tpu as pltpu

# ----- module configuration (defaults of the PyTorch module) -----------------
VOXEL_SIZE = (0.2, 0.2, 4.0)
PC_RANGE = (0.0, -40.0, -3.0, 70.4, 40.0, 1.0)
VX, VY, VZ = VOXEL_SIZE
X_OFF = VX / 2.0 + PC_RANGE[0]
Y_OFF = VY / 2.0 + PC_RANGE[1]
Z_OFF = VZ / 2.0 + PC_RANGE[2]
NX = int(round((PC_RANGE[3] - PC_RANGE[0]) / VX))   # 352
NY = int(round((PC_RANGE[4] - PC_RANGE[1]) / VY))   # 400
NZ = int(round((PC_RANGE[5] - PC_RANGE[2]) / VZ))   # 1
FEAT_OUT = 64
FEAT_AUG = 9            # 3 (xyz) + 3 (cluster) + 3 (center), see NOTE above
BN_EPS = 1e-3
NEG_INIT = -1e30        # finite "-inf" surrogate for the running max (no inf-inf NaN)


# ----- kernel 1: point pass ----------------------------------------------------
# grid over point tiles; voxel-space accumulators stay resident in VMEM (outputs
# with a constant index_map) and are written back to HBM once at the end.
def _point_scatter_kernel(vlo_ref, vhi_ref, pts_ref, w_ref, zmax_ref, xyzsum_ref):
    i = pl.program_id(0)

    @pl.when(i == 0)
    def _init():
        zmax_ref[...] = jnp.full(zmax_ref.shape, NEG_INIT, jnp.float32)
        xyzsum_ref[...] = jnp.zeros(xyzsum_ref.shape, jnp.float32)

    pts = pts_ref[...]                       # (TP, 8): x, y, z, vid, 0, 0, 0, 0
    vid = pts[:, 3:4]                        # (TP, 1) voxel id as f32 (exact < 2^24)

    # per-point transform: xyz @ (Wxyz+Wclu+Wcen)*bn_scale.  K == 3, so three
    # broadcast FMAs on the VPU (exact f32) instead of a 3/256-utilized MXU matmul.
    z = (pts[:, 0:1] * w_ref[0:1, :]
         + pts[:, 1:2] * w_ref[1:2, :]
         + pts[:, 2:3] * w_ref[2:3, :])      # (TP, 64)

    v_lo = vlo_ref[i]                        # SMEM scalar prefetch: first voxel in tile
    v_hi = vhi_ref[i]                        # last voxel in tile

    # Points are sorted by voxel id, so this tile only touches the contiguous voxel
    # range [v_lo, v_hi]; accumulate segment max(z) / sum(xyz) into the resident
    # voxel-space accumulators.
    # TODO(synk): for very dense tiles, replace the full-tile mask with a windowed
    # segment reduction driven by prefetched per-voxel start offsets.
    def body(v, carry):
        vf = lax.convert_element_type(v, jnp.float32)
        m = vid == vf                                                        # (TP, 1)
        zrow = jnp.max(jnp.where(m, z, NEG_INIT), axis=0, keepdims=True)     # (1, 64)
        srow = jnp.sum(jnp.where(m, pts, 0.0), axis=0, keepdims=True)        # (1, 8)
        zmax_ref[pl.ds(v, 1), :] = jnp.maximum(zmax_ref[pl.ds(v, 1), :], zrow)
        xyzsum_ref[pl.ds(v, 1), :] = xyzsum_ref[pl.ds(v, 1), :] + srow
        return carry

    lax.fori_loop(v_lo, v_hi + 1, body, 0)


# ----- kernel 2: voxel finalize -------------------------------------------------
# out = ReLU(zmax + shift - vmean@Wclu_eff - center@Wcen_eff)
def _voxel_finalize_kernel(zmax_ref, xs_ref, aux_ref, w2_ref, w3_ref, shift_ref,
                           out_ref):
    xs = xs_ref[...]                         # (TV, 8): sum_x, sum_y, sum_z, *, 0...
    aux = aux_ref[...]                       # (TV, 8): cx, cy, cz, 1/count, 0...
    mean = xs * aux[:, 3:4]                  # lanes 0..2 hold the per-voxel xyz mean
    b = shift_ref[0:1, :]
    b = b - (mean[:, 0:1] * w2_ref[0:1, :]
             + mean[:, 1:2] * w2_ref[1:2, :]
             + mean[:, 2:3] * w2_ref[2:3, :])
    b = b - (aux[:, 0:1] * w3_ref[0:1, :]
             + aux[:, 1:2] * w3_ref[1:2, :]
             + aux[:, 2:3] * w3_ref[2:3, :])
    out_ref[...] = jnp.maximum(zmax_ref[...] + b, 0.0)


# ----- wrapper ------------------------------------------------------------------
def dynamic_pillar_feature_net(features, coors, params):
    """features: (N, 4) float32 [x,y,z,intensity]; coors: (N, 4) int as (b, z, y, x)."""
    feat_np = np.asarray(features, np.float32)
    coor_np = np.asarray(coors, np.int64)
    n_pts = int(feat_np.shape[0])

    # TODO(synk): dynamic-voxelization bookkeeping (np.unique / argsort) produces
    # data-dependent shapes with no clean Pallas equivalent; it stays in host glue.
    # Only O(N) + O(V) data is shipped to the device (no O(V*N) one-hot matrices).
    keys = ((coor_np[:, 0] * NZ + coor_np[:, 1]) * NY + coor_np[:, 2]) * NX \
           + coor_np[:, 3]
    uniq, first_idx, inv, counts = np.unique(
        keys, return_index=True, return_inverse=True, return_counts=True)
    n_vox = int(uniq.shape[0])
    voxel_coors = coor_np[first_idx].astype(np.int32)            # (V, 4), sorted order

    order = np.argsort(inv, kind="stable")                       # sort points by voxel
    inv_sorted = inv[order].astype(np.int32)
    xyz_sorted = feat_np[order, :3]

    # --- tiling ------------------------------------------------------------------
    tile_pts = 2048 if n_pts >= 4096 else max(8, int(math.ceil(n_pts / 2 / 8)) * 8)
    n_pad = int(math.ceil(n_pts / tile_pts)) * tile_pts
    num_tiles = n_pad // tile_pts

    tile_vox = 1024 if n_vox >= 2048 else max(8, int(math.ceil((n_vox + 1) / 2 / 8)) * 8)
    v_pad = int(math.ceil((n_vox + 1) / tile_vox)) * tile_vox    # >= n_vox + 1 pad row

    # --- packed per-point input (sorted): [x, y, z, vid, 0, 0, 0, 0] --------------
    pts_packed = np.zeros((n_pad, 8), np.float32)
    pts_packed[:n_pts, 0:3] = xyz_sorted
    pts_packed[:n_pts, 3] = inv_sorted.astype(np.float32)
    pts_packed[n_pts:, 3] = float(n_vox)                         # padding -> pad voxel

    vid_all = pts_packed[:, 3].astype(np.int32)
    tile_vlo = np.ascontiguousarray(vid_all[0::tile_pts])        # (num_tiles,)
    tile_vhi = np.ascontiguousarray(vid_all[tile_pts - 1::tile_pts])

    # --- per-voxel aux: [center_x, center_y, center_z, 1/count, 0, 0, 0, 0] -------
    vox_aux = np.zeros((v_pad, 8), np.float32)
    vox_aux[:n_vox, 0] = voxel_coors[:, 3] * VX + X_OFF
    vox_aux[:n_vox, 1] = voxel_coors[:, 2] * VY + Y_OFF
    vox_aux[:n_vox, 2] = voxel_coors[:, 1] * VZ + Z_OFF
    vox_aux[:n_vox, 3] = 1.0 / counts.astype(np.float32)

    # --- fold BN (eval) into the Linear weight; split per feature group -----------
    w_t, scale, shift = params                                   # (9,64), (1,64), (1,64)
    w_t = np.asarray(w_t, np.float32)
    scale = np.asarray(scale, np.float32)
    shift = np.asarray(shift, np.float32)
    w1e, w2e, w3e = w_t[0:3] * scale, w_t[3:6] * scale, w_t[6:9] * scale

    def _pad8(w):
        out = np.zeros((8, FEAT_OUT), np.float32)
        out[: w.shape[0]] = w
        return out

    w_all = _pad8(w1e + w2e + w3e)   # per-point weight (xyz contributions fused)
    w_clu = _pad8(w2e)               # applied to -vmean at voxel granularity
    w_cen = _pad8(w3e)               # applied to -center at voxel granularity
    shift8 = _pad8(shift)

    # --- call 1: point pass (grid over point tiles, accumulators resident) --------
    zmax, xyzsum = pl.pallas_call(
        _point_scatter_kernel,
        out_shape=(jax.ShapeDtypeStruct((v_pad, FEAT_OUT), jnp.float32),
                   jax.ShapeDtypeStruct((v_pad, 8), jnp.float32)),
        grid_spec=pltpu.PrefetchScalarGridSpec(
            num_scalar_prefetch=2,
            grid=(num_tiles,),
            in_specs=[pl.BlockSpec((tile_pts, 8), lambda i, vlo, vhi: (i, 0)),
                      pl.BlockSpec((8, FEAT_OUT), lambda i, vlo, vhi: (0, 0))],
            out_specs=(pl.BlockSpec((v_pad, FEAT_OUT), lambda i, vlo, vhi: (0, 0)),
                       pl.BlockSpec((v_pad, 8), lambda i, vlo, vhi: (0, 0))),
        ),
        compiler_params=pltpu.CompilerParams(
            dimension_semantics=("arbitrary",),          # accumulator across tiles
            vmem_limit_bytes=48 * 1024 * 1024),
    )(jnp.asarray(tile_vlo), jnp.asarray(tile_vhi),
      jnp.asarray(pts_packed), jnp.asarray(w_all))

    # --- call 2: voxel finalize (grid over voxel blocks) ---------------------------
    vfeat = pl.pallas_call(
        _voxel_finalize_kernel,
        out_shape=jax.ShapeDtypeStruct((v_pad, FEAT_OUT), jnp.float32),
        grid=(v_pad // tile_vox,),
        in_specs=[pl.BlockSpec((tile_vox, FEAT_OUT), lambda i: (i, 0)),
                  pl.BlockSpec((tile_vox, 8), lambda i: (i, 0)),
                  pl.BlockSpec((tile_vox, 8), lambda i: (i, 0)),
                  pl.BlockSpec((8, FEAT_OUT), lambda i: (0, 0)),
                  pl.BlockSpec((8, FEAT_OUT), lambda i: (0, 0)),
                  pl.BlockSpec((8, FEAT_OUT), lambda i: (0, 0))],
        out_specs=pl.BlockSpec((tile_vox, FEAT_OUT), lambda i: (i, 0)),
        compiler_params=pltpu.CompilerParams(dimension_semantics=("parallel",)),
    )(zmax, xyzsum, jnp.asarray(vox_aux),
      jnp.asarray(w_clu), jnp.asarray(w_cen), jnp.asarray(shift8))

    return vfeat[:n_vox], jnp.asarray(voxel_coors)


# ----- deterministic parameter init ---------------------------------------------
def init_params(key):
    # nn.Linear(9, 64, bias=False): torch weight (64, 9); kernel uses its transpose
    bound = 1.0 / math.sqrt(FEAT_AUG)
    w = jax.random.uniform(key, (FEAT_OUT, FEAT_AUG), jnp.float32, -bound, bound)
    w_t = jnp.transpose(w)                                        # (9, 64)
    # BatchNorm1d(64, eps=1e-3) in eval mode with deterministic stats, folded into a
    # per-channel affine (scale, shift).
    i = jnp.arange(FEAT_OUT, dtype=jnp.float32)
    gamma = 1.0 + 0.05 * jnp.cos(i)
    beta = 0.02 * jnp.sin(i)
    run_mean = 0.01 * jnp.sin(0.5 * i)
    run_var = 1.0 + 0.1 * (i / FEAT_OUT)
    scale = (gamma / jnp.sqrt(run_var + BN_EPS))[None, :]         # (1, 64)
    shift = (beta - run_mean * scale[0])[None, :]                 # (1, 64)
    return w_t, scale, shift


# ----- pure-numpy reference for correctness --------------------------------------
def _reference(features, coors, params):
    w_t, scale, shift = [np.asarray(p, np.float64) for p in params]
    feat = np.asarray(features, np.float64)
    coor = np.asarray(coors, np.int64)
    xyz = feat[:, :3]
    keys = ((coor[:, 0] * NZ + coor[:, 1]) * NY + coor[:, 2]) * NX + coor[:, 3]
    uniq, inv = np.unique(keys, return_inverse=True)
    n_vox = uniq.shape[0]
    counts = np.bincount(inv, minlength=n_vox).astype(np.float64)
    sums = np.zeros((n_vox, 3), np.float64)
    np.add.at(sums, inv, xyz)
    mean = sums / counts[:, None]
    f_cluster = xyz - mean[inv]
    centers = np.stack([coor[:, 3] * VX + X_OFF,
                        coor[:, 2] * VY + Y_OFF,
                        coor[:, 1] * VZ + Z_OFF], axis=1)
    f_center = xyz - centers
    aug = np.concatenate([xyz, f_cluster, f_center], axis=1)      # (N, 9)
    y = np.maximum(aug @ w_t * scale + shift, 0.0)
    vmax = np.full((n_vox, FEAT_OUT), -np.inf)
    np.maximum.at(vmax, inv, y)
    return vmax.astype(np.float32)


if __name__ == "__main__":
    key = jax.random.PRNGKey(0)
    k_cx, k_cy, k_sel, k_jit, k_int, k_w = jax.random.split(key, 6)

    N_PTS = 64
    BATCH = 2
    CELLS_PER_BATCH = 6

    # pick a few pillar cells per batch so voxels contain multiple points
    cell_x = np.asarray(jax.random.randint(k_cx, (BATCH, CELLS_PER_BATCH), 0, NX))
    cell_y = np.asarray(jax.random.randint(k_cy, (BATCH, CELLS_PER_BATCH), 0, NY))
    batch_idx = np.repeat(np.arange(BATCH), N_PTS // BATCH)       # sorted by batch
    sel = np.asarray(jax.random.randint(k_sel, (N_PTS,), 0, CELLS_PER_BATCH))
    x_idx = cell_x[batch_idx, sel]
    y_idx = cell_y[batch_idx, sel]
    z_idx = np.zeros((N_PTS,), np.int64)
    coors = np.stack([batch_idx, z_idx, y_idx, x_idx], axis=1).astype(np.int32)

    u = np.asarray(jax.random.uniform(k_jit, (N_PTS, 3)))
    px = PC_RANGE[0] + (x_idx + u[:, 0]) * VX
    py = PC_RANGE[1] + (y_idx + u[:, 1]) * VY
    pz = PC_RANGE[2] + u[:, 2] * VZ
    intensity = np.asarray(jax.random.uniform(k_int, (N_PTS,)))
    features = np.stack([px, py, pz, intensity], axis=1).astype(np.float32)

    params = init_params(k_w)

    voxel_feats, voxel_coors = dynamic_pillar_feature_net(features, coors, params)
    voxel_feats = jax.block_until_ready(voxel_feats)
    voxel_coors = jax.block_until_ready(voxel_coors)

    ref = _reference(features, coors, params)
    np.testing.assert_allclose(np.asarray(voxel_feats), ref, rtol=1e-4, atol=1e-4)
    assert voxel_coors.shape == (ref.shape[0], 4)

    print("KERNEL_OK")
</pallas_src>

<mosaic_0001>
module attributes {stable_mosaic.version = 11 : i64} {
  func.func @_point_scatter_kernel(%arg0: i32, %arg1: memref<2xi32, #tpu.memory_space<smem>>, %arg2: memref<2xi32, #tpu.memory_space<smem>>, %arg3: memref<32x8xf32, #tpu.memory_space<vmem>>, %arg4: memref<8x64xf32, #tpu.memory_space<vmem>>, %arg5: memref<16x64xf32, #tpu.memory_space<vmem>>, %arg6: memref<16x8xf32, #tpu.memory_space<vmem>>) attributes {dimension_semantics = [#tpu.dimension_semantics<arbitrary>], iteration_bounds = array<i64: 2>, scalar_prefetch = 2 : i64, scratch_operands = 0 : i64, tpu.core_type = #tpu.core_type<tc>, window_params = [{transform_indices = @transform_0, window_bounds = array<i64: 32, 8>}, {pipeline_mode = #tpu.pipeline_mode<synchronous>, transform_indices = @transform_1, window_bounds = array<i64: 8, 64>}, {pipeline_mode = #tpu.pipeline_mode<synchronous>, transform_indices = @transform_2, window_bounds = array<i64: 16, 64>}, {pipeline_mode = #tpu.pipeline_mode<synchronous>, transform_indices = @transform_3, window_bounds = array<i64: 16, 8>}]} {
    %c0_i32 = arith.constant 0 : i32
    %0 = arith.cmpi eq, %arg0, %c0_i32 : i32
    %1 = arith.extui %0 : i1 to i32
    %c0_i32_0 = arith.constant 0 : i32
    %2 = arith.cmpi ne, %1, %c0_i32_0 : i32
    scf.if %2 {
      %cst = arith.constant -1.000000e+30 : f32
      %29 = vector.broadcast %cst : f32 to vector<16x64xf32>
      %c0_8 = arith.constant 0 : index
      %c0_9 = arith.constant 0 : index
      %30 = vector.load %arg5[%c0_8, %c0_9] : memref<16x64xf32, #tpu.memory_space<vmem>>, vector<16x64xf32>
      tpu.vector_store %arg5[%c0_8, %c0_9], %29 {strides = array<i32>} : memref<16x64xf32, #tpu.memory_space<vmem>>, vector<16x64xf32>,
      %cst_10 = arith.constant 0.000000e+00 : f32
      %31 = vector.broadcast %cst_10 : f32 to vector<16x8xf32>
      %c0_11 = arith.constant 0 : index
      %c0_12 = arith.constant 0 : index
      %32 = vector.load %arg6[%c0_11, %c0_12] : memref<16x8xf32, #tpu.memory_space<vmem>>, vector<16x8xf32>
      tpu.vector_store %arg6[%c0_11, %c0_12], %31 {strides = array<i32>} : memref<16x8xf32, #tpu.memory_space<vmem>>, vector<16x8xf32>,
    } else {
    }
    %c0 = arith.constant 0 : index
    %c0_1 = arith.constant 0 : index
    %3 = vector.load %arg3[%c0, %c0_1] : memref<32x8xf32, #tpu.memory_space<vmem>>, vector<32x8xf32>
    %4 = vector.extract_strided_slice %3 {offsets = [0, 3], sizes = [32, 1], strides = [1, 1]} : vector<32x8xf32> to vector<32x1xf32>
    %5 = vector.extract_strided_slice %3 {offsets = [0, 0], sizes = [32, 1], strides = [1, 1]} : vector<32x8xf32> to vector<32x1xf32>
    %c0_2 = arith.constant 0 : index
    %c0_3 = arith.constant 0 : index
    %6 = vector.load %arg4[%c0_2, %c0_3] : memref<8x64xf32, #tpu.memory_space<vmem>>, vector<1x64xf32>
    %7 = vector.broadcast %5 : vector<32x1xf32> to vector<32x64xf32>
    %8 = vector.broadcast %6 : vector<1x64xf32> to vector<32x64xf32>
    %9 = arith.mulf %7, %8 : vector<32x64xf32>
    %10 = vector.extract_strided_slice %3 {offsets = [0, 1], sizes = [32, 1], strides = [1, 1]} : vector<32x8xf32> to vector<32x1xf32>
    %c1 = arith.constant 1 : index
    %c0_4 = arith.constant 0 : index
    %11 = vector.load %arg4[%c1, %c0_4] : memref<8x64xf32, #tpu.memory_space<vmem>>, vector<1x64xf32>
    %12 = vector.broadcast %10 : vector<32x1xf32> to vector<32x64xf32>
    %13 = vector.broadcast %11 : vector<1x64xf32> to vector<32x64xf32>
    %14 = arith.mulf %12, %13 : vector<32x64xf32>
    %15 = arith.addf %9, %14 : vector<32x64xf32>
    %16 = vector.extract_strided_slice %3 {offsets = [0, 2], sizes = [32, 1], strides = [1, 1]} : vector<32x8xf32> to vector<32x1xf32>
    %c2 = arith.constant 2 : index
    %c0_5 = arith.constant 0 : index
    %17 = vector.load %arg4[%c2, %c0_5] : memref<8x64xf32, #tpu.memory_space<vmem>>, vector<1x64xf32>
    %18 = vector.broadcast %16 : vector<32x1xf32> to vector<32x64xf32>
    %19 = vector.broadcast %17 : vector<1x64xf32> to vector<32x64xf32>
    %20 = arith.mulf %18, %19 : vector<32x64xf32>
    %21 = arith.addf %15, %20 : vector<32x64xf32>
    %22 = arith.index_cast %arg0 : i32 to index
    %23 = memref.load %arg1[%22] : memref<2xi32, #tpu.memory_space<smem>>
    %24 = arith.index_cast %arg0 : i32 to index
    %25 = memref.load %arg2[%24] : memref<2xi32, #tpu.memory_space<smem>>
    %c1_i32 = arith.constant 1 : i32
    %26 = arith.addi %25, %c1_i32 : i32
    %c0_i32_6 = arith.constant 0 : i32
    %27 = arith.subi %26, %23 : i32
    %28 = arith.addi %23, %27 : i32
    %c1_i32_7 = arith.constant 1 : i32
    scf.for %arg7 = %23 to %28 step %c1_i32_7  : i32 {
      %29 = arith.sitofp %arg7 : i32 to f32
      %30 = vector.broadcast %29 : f32 to vector<32x1xf32>
      %31 = arith.cmpf oeq, %4, %30 : vector<32x1xf32>
      %cst = arith.constant -1.000000e+30 : f32
      %32 = vector.shape_cast %31 : vector<32x1xi1> to vector<32x1xi1>
      %33 = vector.broadcast %32 : vector<32x1xi1> to vector<32x64xi1>
      %34 = vector.broadcast %cst : f32 to vector<32x64xf32>
      %35 = arith.select %33, %21, %34 : vector<32x64xi1>, vector<32x64xf32>
      %cst_8 = arith.constant dense<0xFF800000> : vector<64xf32>
      %36 = vector.multi_reduction <maximumf>, %35, %cst_8 [0] : vector<32x64xf32> to vector<64xf32>
      %37 = vector.shape_cast %36 : vector<64xf32> to vector<1x64xf32>
      %cst_9 = arith.constant 0.000000e+00 : f32
      %38 = vector.shape_cast %31 : vector<32x1xi1> to vector<32x1xi1>
      %39 = vector.broadcast %38 : vector<32x1xi1> to vector<32x8xi1>
      %40 = vector.broadcast %cst_9 : f32 to vector<32x8xf32>
      %41 = arith.select %39, %3, %40 : vector<32x8xi1>, vector<32x8xf32>
      %cst_10 = arith.constant dense<0.000000e+00> : vector<8xf32>
      %42 = vector.multi_reduction <add>, %41, %cst_10 [0] : vector<32x8xf32> to vector<8xf32>
      %43 = vector.shape_cast %42 : vector<8xf32> to vector<1x8xf32>
      %44 = arith.index_cast %arg7 : i32 to index
      %c0_11 = arith.constant 0 : index
      %45 = vector.load %arg5[%44, %c0_11] : memref<16x64xf32, #tpu.memory_space<vmem>>, vector<1x64xf32>
      %46 = arith.maximumf %45, %37 : vector<1x64xf32>
      %47 = arith.index_cast %arg7 : i32 to index
      %c0_12 = arith.constant 0 : index
      %48 = vector.load %arg5[%47, %c0_12] : memref<16x64xf32, #tpu.memory_space<vmem>>, vector<1x64xf32>
      tpu.vector_store %arg5[%47, %c0_12], %46 {strides = array<i32>} : memref<16x64xf32, #tpu.memory_space<vmem>>, vector<1x64xf32>,
      %49 = arith.index_cast %arg7 : i32 to index
      %c0_13 = arith.constant 0 : index
      %50 = vector.load %arg6[%49, %c0_13] : memref<16x8xf32, #tpu.memory_space<vmem>>, vector<1x8xf32>
      %51 = arith.addf %50, %43 : vector<1x8xf32>
      %52 = arith.index_cast %arg7 : i32 to index
      %c0_14 = arith.constant 0 : index
      %53 = vector.load %arg6[%52, %c0_14] : memref<16x8xf32, #tpu.memory_space<vmem>>, vector<1x8xf32>
      tpu.vector_store %arg6[%52, %c0_14], %51 {strides = array<i32>} : memref<16x8xf32, #tpu.memory_space<vmem>>, vector<1x8xf32>,
    }
    return
  }
  func.func @transform_0(%arg0: i32, %arg1: memref<2xi32, #tpu.memory_space<smem>>, %arg2: memref<2xi32, #tpu.memory_space<smem>>) -> (i32, i32) {
    %c0_i32 = arith.constant 0 : i32
    %c0_i32_0 = arith.constant 0 : i32
    return %arg0, %c0_i32 : i32, i32
  }
  func.func @transform_1(%arg0: i32, %arg1: memref<2xi32, #tpu.memory_space<smem>>, %arg2: memref<2xi32, #tpu.memory_space<smem>>) -> (i32, i32) {
    %c0_i32 = arith.constant 0 : i32
    %c0_i32_0 = arith.constant 0 : i32
    %c0_i32_1 = arith.constant 0 : i32
    return %c0_i32, %c0_i32_0 : i32, i32
  }
  func.func @transform_2(%arg0: i32, %arg1: memref<2xi32, #tpu.memory_space<smem>>, %arg2: memref<2xi32, #tpu.memory_space<smem>>) -> (i32, i32) {
    %c0_i32 = arith.constant 0 : i32
    %c0_i32_0 = arith.constant 0 : i32
    %c0_i32_1 = arith.constant 0 : i32
    return %c0_i32, %c0_i32_0 : i32, i32
  }
  func.func @transform_3(%arg0: i32, %arg1: memref<2xi32, #tpu.memory_space<smem>>, %arg2: memref<2xi32, #tpu.memory_space<smem>>) -> (i32, i32) {
    %c0_i32 = arith.constant 0 : i32
    %c0_i32_0 = arith.constant 0 : i32
    %c0_i32_1 = arith.constant 0 : i32
    return %c0_i32, %c0_i32_0 : i32, i32
  }
}

</mosaic_0001>

<llo_original>
// kernel: tpu_custom_call.1
$region0: #{tpu_custom_call.1}
  #allocation0 [shape = 'u32[]', space=smem, size = 0x4, offset = 0x4, fixed_abs, tag = 'smem constant byte address 0x4 - core index']
  #allocation1 [shape = 'u32[72,128]{1,0:T(1,128)}', space=vmem, size = 0x9000, scoped, tag = 'internal scratch']
  #allocation2 [shape = 's32[1]{0}', space=sflag, size = 0x4, scoped, tag = 'scoped memory for tpu_custom_call.1']
  #allocation3 [shape = 'u8[512]{0}', space=smem, size = 0x200, scoped, tag = 'prefetched SMEM operand 0']
  #allocation4 [shape = 'u8[512]{0}', space=smem, size = 0x200, scoped, tag = 'prefetched SMEM operand 1']
  %s0 = inlined_call_operand.vmem [shape: s32[2], index: 0, kind: input, shape index: {}]
  %s1 = inlined_call_operand.vmem [shape: s32[2], index: 1, kind: input, shape index: {}]
  %s2 = inlined_call_operand.vmem [shape: f32[64,8], index: 2, kind: input, shape index: {}]
  %s3 = inlined_call_operand.vmem [shape: f32[8,64], index: 3, kind: input, shape index: {}]
  %s4 = inlined_call_operand.hbm [shape: f32[16,64], index: 4, kind: output, shape index: {0}]
  %s5 = inlined_call_operand.vmem [shape: f32[16,8], index: 5, kind: output, shape index: {1}]
  %6 = xla_tuple %s4, %s5
  %s7 = sld [smem:[#allocation0]]
  $region60: #{tpu_custom_call.1} parent=0
    _
  %s9 = ssub.s32 1, %s7
  %s10 = scalar_select 0, %s9, %s7
  %s12 = sshll.u32 %s0, 4
  %s13 = int_to_ptr.vmem [resolvable:$true] %s12
  %15 = dma.vmem_to_smem %s13, 16, [#allocation3], [#allocation2]
  %s17 = sshll.u32 %s1, 4
  %s18 = int_to_ptr.vmem [resolvable:$true] %s17
  %20 = dma.vmem_to_smem %s18, 16, [#allocation4], [#allocation2]
  %22 = dma.done [#allocation2], 32
  %23 = sfence
  $region1: #{tpu_custom_call.1} parent=0
    #allocation5 [shape = 'u8[8192]{0}', space=vmem, size = 0x2000, scoped, tag = 'output window, operand 0, single buffered']
    #allocation6 [shape = 's32[2]{0}', space=sflag, size = 0x8, scoped, tag = 'scoped memory for tpu_custom_call.1']
    %24 = vsyncpa [#allocation6], 0
    loop: start=0, step=1, limit=4
    $region2: #{tpu_custom_call.1} parent=1 // loop_pre_header
      _
    $region3: #{tpu_custom_call.1} parent=1 // loop_header
      %s26 = sphi 0, %s30
      %p27 = scmp.ge.s32.totalorder %s26, 4
      %s36 = sphi 0, %s38
      %s39 = sphi 0, %s36
      %s40 = sphi 0, %s39
      %s56 = sphi 0, %s40
      %s60 = sphi 0, %s60
      %s62 = sphi 0, %s60
      %s63 = sphi 0, %s62
      %s77 = sphi 0, %s63
      %s81 = sphi 0, %s81
      %s83 = sphi 0, %s81
      %s84 = sphi 0, %s83
      %s98 = sphi 0, %s84
      %s102 = sphi 0, %s102
      %s104 = sphi 0, %s102
      %s105 = sphi 0, %s104
      %s119 = sphi 0, %s105
    $region4: #{tpu_custom_call.1} parent=1 // loop_header_branch
      %29 = sbr.rel (%p27) target = $region8
    $region5: #{tpu_custom_call.1} parent=1 // loop_body
      %s31 = ssub.s32 %s26, 1
      %s32 = ssub.s32 %s26, 2
      %s33 = sadd.s32 %s26, 1
      %s34 = ssub.s32 %s26, %s33
      %p35 = scmp.eq.s32.totalorder %s34, 0
      %s37 = sadd.s32 %s36, 1
      %s38 = scalar_select %p35, %s36, %s37
      %p41 = pneg %p35
      %p42 = scmp.eq.s32.totalorder %s26, 1
      %p43 = por %p41, %p42
      %p44 = scmp.ne.s32.totalorder %s36, %s39
      %p45 = scmp.eq.s32.totalorder %s26, 0
      %p46 = por %p44, %p45
      %p47 = scmp.ne.s32.totalorder %s36, %s39
      %p48 = scmp.eq.s32.totalorder %s31, 1
      %p49 = por %p47, %p48
      %p50 = scmp.ne.s32.totalorder %s39, %s40
      %p51 = scmp.eq.s32.totalorder %s31, 0
      %p52 = por %p50, %p51
      %p53 = scmp.ne.s32.totalorder %s39, %s40
      %p54 = scmp.eq.s32.totalorder %s32, 1
      %p55 = por %p53, %p54
      %p57 = scmp.ne.s32.totalorder %s40, %s56
      %p58 = scmp.eq.s32.totalorder %s32, 0
      %p59 = por %p57, %p58
      %s61 = sadd.s32 %s60, 1
      %p64 = scmp.eq.s32.totalorder %s26, 1
      %p65 = scmp.ne.s32.totalorder %s60, %s62
      %p66 = scmp.eq.s32.totalorder %s26, 0
      %p67 = por %p65, %p66
      %p68 = scmp.ne.s32.totalorder %s60, %s62
      %p69 = scmp.eq.s32.totalorder %s31, 1
      %p70 = por %p68, %p69
      %p71 = scmp.ne.s32.totalorder %s62, %s63
      %p72 = scmp.eq.s32.totalorder %s31, 0
      %p73 = por %p71, %p72
      %p74 = scmp.ne.s32.totalorder %s62, %s63
      %p75 = scmp.eq.s32.totalorder %s32, 1
      %p76 = por %p74, %p75
      %p78 = scmp.ne.s32.totalorder %s63, %s77
      %p79 = scmp.eq.s32.totalorder %s32, 0
      %p80 = por %p78, %p79
      %s82 = sadd.s32 %s81, 1
      %p85 = scmp.eq.s32.totalorder %s26, 1
      %p86 = scmp.ne.s32.totalorder %s81, %s83
      %p87 = scmp.eq.s32.totalorder %s26, 0
      %p88 = por %p86, %p87
      %p89 = scmp.ne.s32.totalorder %s81, %s83
      %p90 = scmp.eq.s32.totalorder %s31, 1
      %p91 = por %p89, %p90
      %p92 = scmp.ne.s32.totalorder %s83, %s84
      %p93 = scmp.eq.s32.totalorder %s31, 0
      %p94 = por %p92, %p93
      %p95 = scmp.ne.s32.totalorder %s83, %s84
      %p96 = scmp.eq.s32.totalorder %s32, 1
      %p97 = por %p95, %p96
      %p99 = scmp.ne.s32.totalorder %s84, %s98
      %p100 = scmp.eq.s32.totalorder %s32, 0
      %p101 = por %p99, %p100
      %s103 = sadd.s32 %s102, 1
      %p106 = scmp.eq.s32.totalorder %s26, 1
      %p107 = scmp.ne.s32.totalorder %s102, %s104
      %p108 = scmp.eq.s32.totalorder %s26, 0
      %p109 = por %p107, %p108
      %p110 = scmp.ne.s32.totalorder %s102, %s104
      %p111 = scmp.eq.s32.totalorder %s31, 1
      %p112 = por %p110, %p111
      %p113 = scmp.ne.s32.totalorder %s104, %s105
      %p114 = scmp.eq.s32.totalorder %s31, 0
      %p115 = por %p113, %p114
      %p116 = scmp.ne.s32.totalorder %s104, %s105
      %p117 = scmp.eq.s32.totalorder %s32, 1
      %p118 = por %p116, %p117
      %p120 = scmp.ne.s32.totalorder %s105, %s119
      %p121 = scmp.eq.s32.totalorder %s32, 0
      %p122 = por %p120, %p121
      %p123 = scmp.le.s32.totalorder 1, %s26
      %p124 = scmp.lt.s32.totalorder %s26, 3
      %p125 = pnand %p123, %p124
      %p126 = pneg %p125
      // Predicated region
      $region9: #{tpu_custom_call.1} parent=5 // pred_check
        _
      $region10: #{tpu_custom_call.1} parent=5 // pred_check_branch
        %128 = sbr.rel (%p125) target = $region12
      $region11: #{tpu_custom_call.1} parent=5 // pred_region
        %s129 = ssub.s32 %s26, 1
        // Predicated region
        $region13: #{tpu_custom_call.1} parent=11 // pred_check
          %p130 = pneg %p73
        $region14: #{tpu_custom_call.1} parent=11 // pred_check_branch
          %132 = sbr.rel (%p130) target = $region16
        $region15: #{tpu_custom_call.1} parent=11 // pred_region
          _
        $region16: #{tpu_custom_call.1} parent=11 // pred_fallthru
          _
      $region12: #{tpu_custom_call.1} parent=5 // pred_fallthru
        _
      %p133 = scmp.lt.s32.totalorder %s26, 2
      // Predicated region
      $region17: #{tpu_custom_call.1} parent=5 // pred_check
        %p134 = pneg %p133
      $region18: #{tpu_custom_call.1} parent=5 // pred_check_branch
        %136 = sbr.rel (%p134) target = $region20
      $region19: #{tpu_custom_call.1} parent=5 // pred_region
        // Predicated region
        $region21: #{tpu_custom_call.1} parent=19 // pred_check
          %p137 = pneg %p46
        $region22: #{tpu_custom_call.1} parent=19 // pred_check_branch
          %139 = sbr.rel (%p137) target = $region24
        $region23: #{tpu_custom_call.1} parent=19 // pred_region
          %s140 = smul.u32 4, %s26
          %p141 = scmp.lt.s32.totalorder %s140, 7
          %s142 = scalar_select %p141, %s140, 7
          %s143 = smul.addr %s142, 8
          %s144 = scalar_lea.vmem %s2, %s143
          %s145 = smul.u32 4, %s26
        $region24: #{tpu_custom_call.1} parent=19 // pred_fallthru
          _
      $region20: #{tpu_custom_call.1} parent=5 // pred_fallthru
        _
      %p146 = scmp.le.s32.totalorder 1, %s26
      %p147 = scmp.lt.s32.totalorder %s26, 3
      %p148 = pnand %p146, %p147
      %p149 = pneg %p148
      // Predicated region
      $region25: #{tpu_custom_call.1} parent=5 // pred_check
        _
      $region26: #{tpu_custom_call.1} parent=5 // pred_check_branch
        %151 = sbr.rel (%p148) target = $region28
      $region27: #{tpu_custom_call.1} parent=5 // pred_region
        %s152 = ssub.s32 %s26, 1
        %s153 = smul.u32 4, %s31
        %p154 = scmp.lt.s32.totalorder %s153, 7
        %s155 = scalar_select %p154, %s153, 7
        %s156 = smul.addr %s155, 8
        %s157 = scalar_lea.vmem %s2, %s156
        %p158 = pneg %p52
        %p159 = pneg %p49
        %p160 = pneg %p73
        %p161 = pneg %p70
        %p162 = pneg %p94
        %p163 = pneg %p91
        %p164 = pneg %p115
        %p165 = pneg %p112
        %s166 = smul.u32 4, %s31
        %p167 = scmp.lt.s32.totalorder %s166, 7
        %s168 = scalar_select %p167, %s166, 7
        %s169 = smul.addr %s168, 8
        %s170 = scalar_lea.vmem %s2, %s169
        %s171 = smul.u32 4, %s31
        %p172 = scmp.eq.s32.totalorder %s31, 0
        // Predicated region
        $region29: #{tpu_custom_call.1} parent=27 // pred_check
          %p173 = pneg %p172
        $region30: #{tpu_custom_call.1} parent=27 // pred_check_branch
          %175 = sbr.rel (%p173) target = $region32
        $region31: #{tpu_custom_call.1} parent=27 // pred_region
          %vm176 = vcmask 523264
          %177 = vst.msk [vmem:[#allocation5] sm:$0xff] %vm176, -1e+30
          %178 = vst.msk [vmem:[#allocation5 + $0x8] sm:$0xff] %vm176, -1e+30
          %vm179 = vcmask 64512
          %180 = vst.msk [vmem:[%s5] sm:$0xff] %vm179, 0.0
          %181 = vst.msk [vmem:[%s5 + $0x8] sm:$0xff] %vm179, 0.0
        $region32: #{tpu_custom_call.1} parent=27 // pred_fallthru
          _
        %v182 = vld [vmem:[%s170] sm:$0xff]
        %v183 = vld [vmem:[%s170 + $0x8] sm:$0xff]
        %v184 = vld [vmem:[%s170 + $0x10] sm:$0xff]
        %v185 = vld [vmem:[%s170 + $0x18] sm:$0xff]
        %v186 = vld [vmem:[%s3] sm:$0x1]
        %188 = vset.pattern.permute.xlu0 0
        %189 = vperm.xlu0 %188, %v182
        %v190 = vpop.permute.xlu0 %189
        %193 = vset.pattern.permute.xlu0 0
        %194 = vperm.xlu0 %193, %v183
        %v195 = vpop.permute.xlu0 %194
        %198 = vset.pattern.permute.xlu0 0
        %199 = vperm.xlu0 %198, %v184
        %v200 = vpop.permute.xlu0 %199
        %203 = vset.pattern.permute.xlu0 0
        %204 = vperm.xlu0 %203, %v185
        %v205 = vpop.permute.xlu0 %204
        %v207 = vperm.slane %v186, 0
        %v208 = vmul.f32 %v190, %v207
        %v209 = vmul.f32 %v195, %v207
        %v210 = vmul.f32 %v200, %v207
        %v211 = vmul.f32 %v205, %v207
        %v212 = vld [vmem:[%s3 + $0x1] sm:$0x1]
        %213 = vset.pattern.permute.xlu0 1
        %214 = vperm.xlu0 %213, %v182
        %v215 = vpop.permute.xlu0 %214
        %217 = vset.pattern.permute.xlu0 1
        %218 = vperm.xlu0 %217, %v183
        %v219 = vpop.permute.xlu0 %218
        %221 = vset.pattern.permute.xlu0 1
        %222 = vperm.xlu0 %221, %v184
        %v223 = vpop.permute.xlu0 %222
        %225 = vset.pattern.permute.xlu0 1
        %226 = vperm.xlu0 %225, %v185
        %v227 = vpop.permute.xlu0 %226
        %v229 = vperm.slane %v212, 0
        %v230 = vmul.f32 %v215, %v229
        %v231 = vmul.f32 %v219, %v229
        %v232 = vmul.f32 %v223, %v229
        %v233 = vmul.f32 %v227, %v229
        %v234 = vadd.f32 %v208, %v230
        %v235 = vadd.f32 %v209, %v231
        %v236 = vadd.f32 %v210, %v232
        %v237 = vadd.f32 %v211, %v233
        %v238 = vld [vmem:[%s3 + $0x2] sm:$0x1]
        %239 = vset.pattern.permute.xlu0 2
        %240 = vperm.xlu0 %239, %v182
        %v241 = vpop.permute.xlu0 %240
        %243 = vset.pattern.permute.xlu0 2
        %244 = vperm.xlu0 %243, %v183
        %v245 = vpop.permute.xlu0 %244
        %247 = vset.pattern.permute.xlu0 2
        %248 = vperm.xlu0 %247, %v184
        %v249 = vpop.permute.xlu0 %248
        %251 = vset.pattern.permute.xlu0 2
        %252 = vperm.xlu0 %251, %v185
        %v253 = vpop.permute.xlu0 %252
        %v255 = vperm.slane %v238, 0
        %v256 = vmul.f32 %v241, %v255
        %v257 = vmul.f32 %v245, %v255
        %v258 = vmul.f32 %v249, %v255
        %v259 = vmul.f32 %v253, %v255
        %v260 = vadd.f32 %v234, %v256
        %v261 = vadd.f32 %v235, %v257
        %v262 = vadd.f32 %v236, %v258
        %v263 = vadd.f32 %v237, %v259
        %s264 = sld [smem:[#allocation3 + %s31]]
        %s265 = sld [smem:[#allocation4 + %s31]]
        %s266 = sadd.s32 %s265, 1
        // While loop
        $region33: #{tpu_custom_call.1} parent=27 // loop_pre_header
          _
        $region34: #{tpu_custom_call.1} parent=27 // loop_header
          %s268 = sphi %s264, %s270
          %p269 = scmp.ge.s32.totalorder %s268, %s266
        $region35: #{tpu_custom_call.1} parent=27 // loop_header_branch
          %272 = sbr.rel (%p269) target = $region39
        $region36: #{tpu_custom_call.1} parent=27 // loop_body
          %s273 = scvt.s32.f32 %s268
          %v274 = vstv %s273
          %vm275 = vcmp.eq.f32.partialorder %v182, %v274
          %vm276 = vcmp.eq.f32.partialorder %v183, %v274
          %vm277 = vcmp.eq.f32.partialorder %v184, %v274
          %vm278 = vcmp.eq.f32.partialorder %v185, %v274
          %v279 = vsel %vm275, 1, 0
          %v280 = vsel %vm276, 1, 0
          %v281 = vsel %vm277, 1, 0
          %v282 = vsel %vm278, 1, 0
          %283 = vset.pattern.permute.xlu0 3
          %284 = vperm.xlu0 %283, %v279
          %v285 = vpop.permute.xlu0 %284
          %286 = vset.pattern.permute.xlu0 3
          %287 = vperm.xlu0 %286, %v280
          %v288 = vpop.permute.xlu0 %287
          %289 = vset.pattern.permute.xlu0 3
          %290 = vperm.xlu0 %289, %v281
          %v291 = vpop.permute.xlu0 %290
          %292 = vset.pattern.permute.xlu0 3
          %293 = vperm.xlu0 %292, %v282
          %v294 = vpop.permute.xlu0 %293
          %vm295 = vcmp.eq.s32.totalorder %v285, 1
          %vm296 = vcmp.eq.s32.totalorder %v288, 1
          %vm297 = vcmp.eq.s32.totalorder %v291, 1
          %vm298 = vcmp.eq.s32.totalorder %v294, 1
          %v299 = vsel %vm295, %v260, -1e+30
          %v300 = vsel %vm296, %v261, -1e+30
          %v301 = vsel %vm297, %v262, -1e+30
          %v302 = vsel %vm298, %v263, -1e+30
          %vm303 = vcmask 523264
          %v304 = vsel %vm303, %v299, -inf
          %v305 = vsel %vm303, %v300, -inf
          %v306 = vsel %vm303, %v301, -inf
          %v307 = vsel %vm303, %v302, -inf
          %v308 = vmax.f32 %v304, %v305
          %v309 = vmax.f32 %v306, %v307
          %v310 = vmax.f32 %v308, %v309
          %v311 = vrot.slane %v310, 4
          %v312 = vmax.f32 %v310, %v311
          %v313 = vrot.slane %v312, 2
          %v314 = vmax.f32 %v312, %v313
          %v315 = vrot.slane %v314, 1
          %v316 = vmax.f32 %v314, %v315
          %v317 = vsel %vm295, %v182, 0.0
          %v318 = vsel %vm296, %v183, 0.0
          %v319 = vsel %vm297, %v184, 0.0
          %v320 = vsel %vm298, %v185, 0.0
          %vm321 = vcmask 64512
          %v322 = vsel %vm321, %v317, 0.0
          %v323 = vsel %vm321, %v318, 0.0
          %v324 = vadd.f32 %v322, %v323
          %v325 = vsel %vm321, %v319, 0.0
          %v326 = vadd.f32 %v324, %v325
          %v327 = vsel %vm321, %v320, 0.0
          %v328 = vadd.f32 %v326, %v327
          %v329 = vrot.slane %v328, 4
          %v330 = vadd.f32 %v328, %v329
          %v331 = vrot.slane %v330, 2
          %v332 = vadd.f32 %v330, %v331
          %v333 = vrot.slane %v332, 1
          %v334 = vadd.f32 %v332, %v333
          %s335 = scalar_lea.vmem [#allocation5], %s268
          %v336 = vld [vmem:[%s335] sm:$0x1]
          %v337 = vmax.f32 %v336, %v316
          %vm338 = vcmask 516096
          %339 = vst.msk [vmem:[%s335] sm:$0x1] %vm338, %v337
          %s340 = scalar_lea.vmem %s5, %s268
          %v341 = vld [vmem:[%s340] sm:$0x1]
          %v342 = vadd.f32 %v341, %v334
          %vm343 = vcmask 57344
          %344 = vst.msk [vmem:[%s340] sm:$0x1] %vm343, %v342
        $region37: #{tpu_custom_call.1} parent=27 // loop_footer
          %s270 = sadd.s32 %s268, 1
        $region38: #{tpu_custom_call.1} parent=27 // loop_footer_branch
          %267 = sbr.rel target = $region34
        $region39: #{tpu_custom_call.1} parent=27 // loop_exit
          _
        // Predicated region
        $region40: #{tpu_custom_call.1} parent=27 // pred_check
          %p345 = pneg %p91
        $region41: #{tpu_custom_call.1} parent=27 // pred_check_branch
          %347 = sbr.rel (%p345) target = $region43
        $region42: #{tpu_custom_call.1} parent=27 // pred_region
          %349 = vsyncadd [#allocation6], 0
          %s350 = sshll.u32 [#allocation5], 4
          %s351 = int_to_ptr.vmem [resolvable:$true] %s350
          %s352 = sshll.u32 %s4, 4
          %s353 = int_to_ptr.hbm [resolvable:$true] %s352
          %358 = dma.vmem_to_hbm [thread:$0]  %s351, 256, %s353, [#allocation6], 128, 128, 8
        $region43: #{tpu_custom_call.1} parent=27 // pred_fallthru
          _
        // Predicated region
        $region44: #{tpu_custom_call.1} parent=27 // pred_check
          %p359 = pneg %p112
        $region45: #{tpu_custom_call.1} parent=27 // pred_check_branch
          %361 = sbr.rel (%p359) target = $region47
        $region46: #{tpu_custom_call.1} parent=27 // pred_region
          _
        $region47: #{tpu_custom_call.1} parent=27 // pred_fallthru
          _
        // Predicated region
        $region48: #{tpu_custom_call.1} parent=27 // pred_check
          %p362 = pneg %p91
        $region49: #{tpu_custom_call.1} parent=27 // pred_check_branch
          %364 = sbr.rel (%p362) target = $region51
        $region50: #{tpu_custom_call.1} parent=27 // pred_region
          %366 = dma.done [#allocation6], 256
        $region51: #{tpu_custom_call.1} parent=27 // pred_fallthru
          _
        // Predicated region
        $region52: #{tpu_custom_call.1} parent=27 // pred_check
          %p367 = pneg %p112
        $region53: #{tpu_custom_call.1} parent=27 // pred_check_branch
          %369 = sbr.rel (%p367) target = $region55
        $region54: #{tpu_custom_call.1} parent=27 // pred_region
          _
        $region55: #{tpu_custom_call.1} parent=27 // pred_fallthru
          _
      $region28: #{tpu_custom_call.1} parent=5 // pred_fallthru
        _
      %p370 = scmp.le.s32.totalorder 2, %s26
      // Predicated region
      $region56: #{tpu_custom_call.1} parent=5 // pred_check
        %p371 = pneg %p370
      $region57: #{tpu_custom_call.1} parent=5 // pred_check_branch
        %373 = sbr.rel (%p371) target = $region59
      $region58: #{tpu_custom_call.1} parent=5 // pred_region
        %s374 = ssub.s32 %s26, 2
      $region59: #{tpu_custom_call.1} parent=5 // pred_fallthru
        _
    $region6: #{tpu_custom_call.1} parent=1 // loop_footer
      %s30 = sadd.s32 1, %s26
    $region7: #{tpu_custom_call.1} parent=1 // loop_footer_branch
      %25 = sbr.rel target = $region3
    $region8: #{tpu_custom_call.1} parent=1 // loop_exit
      _
    %375 = vsyncpa [#allocation6], 1
    %s376 = scalar_lea.sflag [#allocation6], 1
    %377 = vsyncpa %s376, 1

</llo_original>
